<compile_context>
chip_gen: v7x
topology: tpu7x:2x2x1
jax: 0.10.0
libtpu: 0.0.40
codegen_flags: <defaults>
</compile_context>

<pallas_src>
import functools

import jax
import jax.numpy as jnp
from jax import lax
from jax.experimental import pallas as pl
from jax.experimental.pallas import tpu as pltpu


def _epilogue(y, scale, bias, activate):
    """Scale + bias + activation in f32. y: (tm, tn) f32."""
    y = y * scale + bias
    if activate == "relu":
        y = jnp.maximum(y, 0.0)
    elif activate == "sigmoid":
        # exp on the EUP + approx reciprocal: keeps the epilogue off the VPU
        # divide path so it stays hidden under MXU/DMA work.
        y = pl.reciprocal(1.0 + jnp.exp(-y), approx=True)
    elif activate == "tanh":
        y = jnp.tanh(y)
    return y


def _fcnet_kernel_single_k(x_ref, w_ref, scale_ref, b_ref, o_ref, *, activate):
    """Fast path: the whole K dimension fits in one tile (2-D grid, no acc)."""
    y = jnp.dot(x_ref[...], w_ref[...], preferred_element_type=jnp.float32)
    y = _epilogue(y, scale_ref[0, 0], b_ref[...].astype(jnp.float32), activate)
    o_ref[...] = y.astype(o_ref.dtype)


def _fcnet_kernel_multi_k(x_ref, w_ref, scale_ref, b_ref, o_ref, acc_ref, *,
                          activate):
    """General path: K-last reduction grid with an f32 VMEM accumulator."""
    k = pl.program_id(2)

    @pl.when(k == 0)
    def _():
        acc_ref[...] = jnp.zeros_like(acc_ref)

    acc_ref[...] += jnp.dot(x_ref[...], w_ref[...],
                            preferred_element_type=jnp.float32)

    @pl.when(k == pl.num_programs(2) - 1)
    def _():
        y = _epilogue(acc_ref[...], scale_ref[0, 0],
                      b_ref[...].astype(jnp.float32), activate)
        o_ref[...] = y.astype(o_ref.dtype)


def _tile_dim(dim, candidates, *, fallback_cap, pad_tile):
    """Pick (tile, padded_dim) for one dimension.

    Prefer the largest candidate that evenly divides `dim`.  Small
    non-divisible dims use the full extent (always a legal block shape).
    Large non-divisible dims are padded up to a multiple of `pad_tile`
    instead of producing one enormous tile.
    """
    for t in candidates:
        if t <= dim and dim % t == 0:
            return t, dim
    if dim <= fallback_cap:
        return dim, dim
    padded = -(-dim // pad_tile) * pad_tile
    return pad_tile, padded


def fcnet_forward(x, v, g, b, *, activate=None, drop=0.0, training=False,
                  operand_dtype=jnp.bfloat16):
    """FCNet forward.

    x: (B, IN); v: (OUT, IN) weight_norm direction; g: scalar gain; b: (OUT,).
    """
    if training and drop > 0.0:
        # TODO(synk): training-mode stochastic dropout (pltpu.prng_*).
        raise NotImplementedError("training-mode dropout not implemented")

    B, IN = x.shape
    OUT, IN_w = v.shape
    assert IN == IN_w, (IN, IN_w)
    out_dtype = x.dtype
    activate = activate.lower() if activate is not None else None

    # Hoisted weight-norm scale (depends only on the weights), from the
    # original-precision V.
    v32 = v.astype(jnp.float32)
    scale = jnp.asarray(g, jnp.float32) * lax.rsqrt(jnp.sum(v32 * v32))
    scale2d = jnp.reshape(scale, (1, 1))

    # MXU operands: bf16 (full-rate path on every generation); weight
    # pre-transposed once so the kernel runs a plain NN dot.
    op_dtype = (jnp.dtype(operand_dtype) if operand_dtype is not None
                else jnp.dtype(x.dtype))
    xk = x.astype(op_dtype)
    wk = jnp.transpose(v).astype(op_dtype)          # (IN, OUT)
    bk = jnp.reshape(b, (1, OUT)).astype(jnp.float32)

    # ---- Tiling ------------------------------------------------------------
    tm, Mp = _tile_dim(B, (512, 256, 128, 64, 32, 16, 8),
                       fallback_cap=1024, pad_tile=256)
    tn, Np = _tile_dim(OUT, (512, 256, 128),
                       fallback_cap=2048, pad_tile=256)
    if IN <= 2048:
        tk, Kp = IN, IN                 # collapse the K grid axis entirely
    else:
        tk, Kp = _tile_dim(IN, (2048, 1024, 512, 256, 128),
                           fallback_cap=0, pad_tile=512)

    grid_m, grid_n, grid_k = Mp // tm, Np // tn, Kp // tk

    # v7x has 2 TensorCores sharded over the "parallel" grid axes: ensure the
    # output grid has at least two tiles when alignment allows it.
    if grid_m * grid_n == 1:
        if tn % 256 == 0:
            tn //= 2
            grid_n = 2
        elif tm % 16 == 0:
            tm //= 2
            grid_m = 2

    # Zero-pad to tile multiples (exact: zero K columns contribute nothing,
    # extra M rows / N cols are sliced off below).
    if (Mp, Kp) != (B, IN):
        xk = jnp.pad(xk, ((0, Mp - B), (0, Kp - IN)))
    if (Kp, Np) != (IN, OUT):
        wk = jnp.pad(wk, ((0, Kp - IN), (0, Np - OUT)))
    if Np != OUT:
        bk = jnp.pad(bk, ((0, 0), (0, Np - OUT)))

    # ---- VMEM budget (generation-aware: stay well inside v7x's 64 MiB) -----
    op_bytes = op_dtype.itemsize
    o_bytes = jnp.dtype(out_dtype).itemsize
    vmem_need = (2 * tm * tk * op_bytes            # x tiles, double-buffered
                 + 2 * tk * tn * op_bytes          # V^T tiles, double-buffered
                 + 2 * tm * tn * o_bytes           # out tiles, double-buffered
                 + 2 * tn * 4                      # bias
                 + (tm * tn * 4 if grid_k > 1 else 0))   # f32 accumulator
    vmem_limit = int(min(48 * 1024 * 1024,
                         max(32 * 1024 * 1024, 2 * vmem_need)))

    # ---- Cost estimate (accounts for tiled re-reads) -------------------------
    cost = pl.CostEstimate(
        flops=2 * B * IN * OUT,
        transcendentals=B * OUT if activate in ("sigmoid", "tanh") else 0,
        bytes_accessed=(grid_n * Mp * Kp * op_bytes     # x streamed grid_n times
                        + grid_m * Kp * Np * op_bytes   # V streamed grid_m times
                        + Np * 4                        # bias
                        + Mp * Np * o_bytes),           # output
    )

    # ---- Grid spec -----------------------------------------------------------
    if grid_k == 1:
        kernel = functools.partial(_fcnet_kernel_single_k, activate=activate)
        grid = (grid_m, grid_n)
        in_specs = [
            pl.BlockSpec((tm, tk), lambda i, j: (i, 0)),                 # x
            pl.BlockSpec((tk, tn), lambda i, j: (0, j)),                 # V^T
            pl.BlockSpec((1, 1), lambda i, j: (0, 0),
                         memory_space=pltpu.SMEM),                       # scale
            pl.BlockSpec((1, tn), lambda i, j: (0, j)),                  # bias
        ]
        out_specs = pl.BlockSpec((tm, tn), lambda i, j: (i, j))
        scratch_shapes = []
        dim_sem = ("parallel", "parallel")
    else:
        kernel = functools.partial(_fcnet_kernel_multi_k, activate=activate)
        grid = (grid_m, grid_n, grid_k)
        in_specs = [
            pl.BlockSpec((tm, tk), lambda i, j, k: (i, k)),              # x
            pl.BlockSpec((tk, tn), lambda i, j, k: (k, j)),              # V^T
            pl.BlockSpec((1, 1), lambda i, j, k: (0, 0),
                         memory_space=pltpu.SMEM),                       # scale
            pl.BlockSpec((1, tn), lambda i, j, k: (0, j)),               # bias
        ]
        out_specs = pl.BlockSpec((tm, tn), lambda i, j, k: (i, j))
        scratch_shapes = [pltpu.VMEM((tm, tn), jnp.float32)]
        dim_sem = ("parallel", "parallel", "arbitrary")

    out = pl.pallas_call(
        kernel,
        out_shape=jax.ShapeDtypeStruct((Mp, Np), out_dtype),
        grid_spec=pltpu.PrefetchScalarGridSpec(
            num_scalar_prefetch=0,
            grid=grid,
            in_specs=in_specs,
            out_specs=out_specs,
            scratch_shapes=scratch_shapes,
        ),
        compiler_params=pltpu.CompilerParams(
            dimension_semantics=dim_sem,
            vmem_limit_bytes=vmem_limit,
        ),
        cost_estimate=cost,
    )(xk, wk, scale2d, bk)

    if (Mp, Np) != (B, OUT):
        out = out[:B, :OUT]
    return out


def fcnet_reference(x, v, g, b, *, activate=None, operand_dtype=jnp.bfloat16):
    """Pure-JAX reference mirroring the kernel's operand rounding."""
    xo = x.astype(operand_dtype).astype(jnp.float32)
    vo = v.astype(operand_dtype).astype(jnp.float32)
    scale = jnp.asarray(g, jnp.float32) / jnp.linalg.norm(v.astype(jnp.float32))
    y = xo @ vo.T * scale + b.astype(jnp.float32)
    if activate == "relu":
        y = jnp.maximum(y, 0.0)
    elif activate == "sigmoid":
        y = jax.nn.sigmoid(y)
    elif activate == "tanh":
        y = jnp.tanh(y)
    return y.astype(x.dtype)


if __name__ == "__main__":
    key = jax.random.PRNGKey(0)
    k_x, k_v, k_b = jax.random.split(key, 3)

    # Small shapes consistent with FCNet(in_size=32, out_size=16) on batch=2.
    batch, in_size, out_size = 2, 32, 16

    x = jax.random.normal(k_x, (batch, in_size), dtype=jnp.float32)
    v = jax.random.normal(k_v, (out_size, in_size), dtype=jnp.float32) * 0.1
    b = jax.random.normal(k_b, (out_size,), dtype=jnp.float32) * 0.01
    # weight_norm init (dim=None): g = ||W||_F of the initial weight.
    g = jnp.linalg.norm(v)

    out = fcnet_forward(x, v, g, b, activate="relu", drop=0.0)
    out = jax.block_until_ready(out)

    ref = fcnet_reference(x, v, g, b, activate="relu")
    assert out.shape == (batch, out_size), out.shape
    assert jnp.allclose(out, ref, atol=1e-3, rtol=1e-3), (
        float(jnp.max(jnp.abs(out - ref))))

    print("KERNEL_OK")
</pallas_src>

<mosaic_0001>
module attributes {stable_mosaic.version = 11 : i64} {
  func.func @_fcnet_kernel_single_k(%arg0: i32, %arg1: i32, %arg2: memref<2x32xbf16, #tpu.memory_space<vmem>>, %arg3: memref<32x16xbf16, #tpu.memory_space<vmem>>, %arg4: memref<1x1xf32, #tpu.memory_space<smem>>, %arg5: memref<1x16xf32, #tpu.memory_space<vmem>>, %arg6: memref<2x16xf32, #tpu.memory_space<vmem>>) attributes {dimension_semantics = [#tpu.dimension_semantics<parallel>, #tpu.dimension_semantics<parallel>], iteration_bounds = array<i64: 1, 1>, scalar_prefetch = 0 : i64, scratch_operands = 0 : i64, tpu.core_type = #tpu.core_type<tc>, window_params = [{transform_indices = @transform_0, window_bounds = array<i64: 2, 32>}, {transform_indices = @transform_1, window_bounds = array<i64: 32, 16>}, {transform_indices = @transform_2, window_bounds = array<i64: 1, 1>}, {transform_indices = @transform_3, window_bounds = array<i64: 1, 16>}, {transform_indices = @transform_4, window_bounds = array<i64: 2, 16>}]} {
    %c0 = arith.constant 0 : index
    %c0_0 = arith.constant 0 : index
    %0 = vector.load %arg2[%c0, %c0_0] : memref<2x32xbf16, #tpu.memory_space<vmem>>, vector<2x32xbf16>
    %c0_1 = arith.constant 0 : index
    %c0_2 = arith.constant 0 : index
    %1 = vector.load %arg3[%c0_1, %c0_2] : memref<32x16xbf16, #tpu.memory_space<vmem>>, vector<32x16xbf16>
    %cst = arith.constant dense<0.000000e+00> : vector<2x16xf32>
    %2 = tpu.matmul %0, %1, %cst {dimension_numbers = #tpu.dot_dimension_numbers<[1], [0], [0], [1], [0, 0, 1, 1], [], []>} : vector<2x32xbf16>, vector<32x16xbf16>, vector<2x16xf32> -> vector<2x16xf32>
    %c0_3 = arith.constant 0 : index
    %c0_4 = arith.constant 0 : index
    %3 = memref.load %arg4[%c0_3, %c0_4] : memref<1x1xf32, #tpu.memory_space<smem>>
    %c0_5 = arith.constant 0 : index
    %c0_6 = arith.constant 0 : index
    %4 = vector.load %arg5[%c0_5, %c0_6] : memref<1x16xf32, #tpu.memory_space<vmem>>, vector<1x16xf32>
    %5 = vector.broadcast %3 : f32 to vector<2x16xf32>
    %6 = arith.mulf %2, %5 : vector<2x16xf32>
    %7 = vector.broadcast %4 : vector<1x16xf32> to vector<2x16xf32>
    %8 = arith.addf %6, %7 : vector<2x16xf32>
    %cst_7 = arith.constant 0.000000e+00 : f32
    %9 = vector.broadcast %cst_7 : f32 to vector<2x16xf32>
    %10 = arith.maximumf %8, %9 : vector<2x16xf32>
    %c0_8 = arith.constant 0 : index
    %c0_9 = arith.constant 0 : index
    %11 = vector.load %arg6[%c0_8, %c0_9] : memref<2x16xf32, #tpu.memory_space<vmem>>, vector<2x16xf32>
    tpu.vector_store %arg6[%c0_8, %c0_9], %10 {strides = array<i32>} : memref<2x16xf32, #tpu.memory_space<vmem>>, vector<2x16xf32>,
    return
  }
  func.func @transform_0(%arg0: i32, %arg1: i32) -> (i32, i32) {
    %c0_i32 = arith.constant 0 : i32
    %c0_i32_0 = arith.constant 0 : i32
    return %arg0, %c0_i32 : i32, i32
  }
  func.func @transform_1(%arg0: i32, %arg1: i32) -> (i32, i32) {
    %c0_i32 = arith.constant 0 : i32
    %c0_i32_0 = arith.constant 0 : i32
    return %c0_i32, %arg1 : i32, i32
  }
  func.func @transform_2(%arg0: i32, %arg1: i32) -> (i32, i32) {
    %c0_i32 = arith.constant 0 : i32
    %c0_i32_0 = arith.constant 0 : i32
    %c0_i32_1 = arith.constant 0 : i32
    return %c0_i32, %c0_i32_0 : i32, i32
  }
  func.func @transform_3(%arg0: i32, %arg1: i32) -> (i32, i32) {
    %c0_i32 = arith.constant 0 : i32
    %c0_i32_0 = arith.constant 0 : i32
    return %c0_i32, %arg1 : i32, i32
  }
  func.func @transform_4(%arg0: i32, %arg1: i32) -> (i32, i32) {
    %c0_i32 = arith.constant 0 : i32
    return %arg0, %arg1 : i32, i32
  }
}

</mosaic_0001>

<llo_original>
// kernel: tpu_custom_call.1
$region0: #{tpu_custom_call.1}
  #allocation0 [shape = 'u32[]', space=smem, size = 0x4, offset = 0x4, fixed_abs, tag = 'smem constant byte address 0x4 - core index']
  #allocation1 [shape = 'u32[144,128]{1,0:T(1,128)}', space=vmem, size = 0x12000, scoped, tag = 'internal scratch']
  #allocation2 [shape = 'f32[1,1]{1,0:T(1,128)S(6)}', space=smem, size = 0x200, scoped, tag = 'scoped memory for tpu_custom_call.1']
  %s0 = inlined_call_operand.vmem [shape: bf16[2,32], index: 0, kind: input, shape index: {}]
  %s1 = inlined_call_operand.vmem [shape: bf16[32,16], index: 1, kind: input, shape index: {}]
  %s2 = inlined_call_operand.<no memory space> [shape: f32[1,1], index: 2, kind: input, shape index: {}]
  %s3 = inlined_call_operand.vmem [shape: f32[1,16], index: 3, kind: input, shape index: {}]
  %s4 = inlined_call_operand.hbm [shape: f32[2,16], index: 4, kind: output, shape index: {}]
  %s5 = sld [smem:[#allocation0]]
  $region26: #{tpu_custom_call.1} parent=0
    _
  %s7 = ssub.s32 1, %s5
  %s8 = scalar_select 0, %s7, %s5
  %9 = sst [smem:[#allocation2]] %s2
  $region1: #{tpu_custom_call.1} parent=0
    #allocation3 [shape = 'u8[1024]{0}', space=vmem, size = 0x400, scoped, tag = 'output window, operand 0, single buffered']
    #allocation4 [shape = 's32[1]{0}', space=sflag, size = 0x4, scoped, tag = 'scoped memory for tpu_custom_call.1']
    %10 = vsyncpa [#allocation4], 0
    // Predicated region
    $region2: #{tpu_custom_call.1} parent=1 // pred_check
      _
    $region3: #{tpu_custom_call.1} parent=1 // pred_check_branch
      %12 = sbr.rel (0) target = $region5
    $region4: #{tpu_custom_call.1} parent=1 // pred_region
      _
    $region5: #{tpu_custom_call.1} parent=1 // pred_fallthru
      _
    // Predicated region
    $region6: #{tpu_custom_call.1} parent=1 // pred_check
      _
    $region7: #{tpu_custom_call.1} parent=1 // pred_check_branch
      %14 = sbr.rel (0) target = $region9
    $region8: #{tpu_custom_call.1} parent=1 // pred_region
      _
    $region9: #{tpu_custom_call.1} parent=1 // pred_fallthru
      _
    // Predicated region
    $region10: #{tpu_custom_call.1} parent=1 // pred_check
      _
    $region11: #{tpu_custom_call.1} parent=1 // pred_check_branch
      %16 = sbr.rel (0) target = $region13
    $region12: #{tpu_custom_call.1} parent=1 // pred_region
      _
    $region13: #{tpu_custom_call.1} parent=1 // pred_fallthru
      _
    // Predicated region
    $region14: #{tpu_custom_call.1} parent=1 // pred_check
      _
    $region15: #{tpu_custom_call.1} parent=1 // pred_check_branch
      %18 = sbr.rel (0) target = $region17
    $region16: #{tpu_custom_call.1} parent=1 // pred_region
      _
    $region17: #{tpu_custom_call.1} parent=1 // pred_fallthru
      _
    %v20 = vld [vmem:[%s0] sm:$0x1]
    %v21 = vld [vmem:[%s1] sm:$0xf]
    %v22 = vld [vmem:[%s1 + $0x4] sm:$0xf]
    %v23 = vld [vmem:[%s1 + $0x8] sm:$0xf]
    %v24 = vld [vmem:[%s1 + $0xc] sm:$0xf]
    %v29 = vunpack.c.l.b16 %v21
    %v30 = vunpack.c.l.b16 %v22
    %v31 = vunpack.c.l.b16 %v23
    %v32 = vunpack.c.l.b16 %v24
    %v33 = vpack.c.b16 %v30, %v29
    %v34 = vpack.c.b16 %v32, %v31
    %vm37 = vcmask 261120
    %v39 = vsel %vm37, %v20, 0
    %41 = vmatprep.subr.bf16.mxu0 0
    %42 = vmatpush1.bf16.msra.mxu0 %v33
    %43 = vmatprep.subr.bf16.mxu0 0
    %44 = vmatpush1.bf16.msra.mxu0 %v34
    %45 = vmatprep.subr.bf16.mxu0 0
    %46 = vmatpush1.bf16.msra.mxu0 0
    %47 = vmatprep.subr.bf16.mxu0 0
    %48 = vmatpush1.bf16.msra.mxu0 0
    %49 = vmatprep.subr.bf16.mxu0 0
    %50 = vmatpush1.bf16.msra.mxu0 0
    %51 = vmatprep.subr.bf16.mxu0 0
    %52 = vmatpush1.bf16.msra.mxu0 0
    %53 = vmatprep.subr.bf16.mxu0 0
    %54 = vmatpush1.bf16.msra.mxu0 0
    %55 = vmatprep.subr.bf16.mxu0 0
    %56 = vmatpush1.bf16.msra.mxu0 0
    %57 = vmatprep.subr.bf16.mxu0 0
    %58 = vmatpush1.bf16.msra.mxu0 0
    %59 = vmatprep.subr.bf16.mxu0 0
    %60 = vmatpush1.bf16.msra.mxu0 0
    %61 = vmatprep.subr.bf16.mxu0 0
    %62 = vmatpush1.bf16.msra.mxu0 0
    %63 = vmatprep.subr.bf16.mxu0 0
    %64 = vmatpush1.bf16.msra.mxu0 0
    %65 = vmatprep.subr.bf16.mxu0 0
    %66 = vmatpush1.bf16.msra.mxu0 0
    %67 = vmatprep.subr.bf16.mxu0 0
    %68 = vmatpush1.bf16.msra.mxu0 0
    %69 = vmatprep.subr.bf16.mxu0 0
    %70 = vmatpush1.bf16.msra.mxu0 0
    %71 = vmatprep.subr.bf16.mxu0 0
    %72 = vmatpush1.bf16.msra.mxu0 0
    %73 = vmatprep.mubr.bf16.mxu0 0
    %74 = vmatmul.mubr.bf16.gmra.mrb[0].mxu0 %v39
    %v75 = vpop.f32.mrb[0].mxu0
    %v76 = vadd.f32 0.0, %v75
    %v77 = vpop.f32.mrb[0].mxu0
    %v78 = vpop.f32.mrb[0].mxu0
    %v79 = vpop.f32.mrb[0].mxu0
    %80 = vdwg.mxu0
    %s81 = sld [smem:[#allocation2]]
    %v82 = vld [vmem:[%s3] sm:$0x1]
    %v83 = vstv %s81
    %v84 = vmul.f32 %v76, %v83
    %v86 = vlaneseq
    %v87 = vshrl.u32 %v86, 7
    %v88 = vsub.s32 0, %v87
    %v89 = vrot.slane %v82, %v88
    %v91 = vadd.f32 %v84, %v89
    %v92 = vmax.f32 %v91, 0.0
    %vm93 = vcmask 123904
    %94 = vst.msk [vmem:[#allocation3] sm:$0x3] %vm93, %v92
    // Predicated region
    $region18: #{tpu_custom_call.1} parent=1 // pred_check
      _
    $region19: #{tpu_custom_call.1} parent=1 // pred_check_branch
      %96 = sbr.rel (0) target = $region21
    $region20: #{tpu_custom_call.1} parent=1 // pred_region
      %s98 = ssub.s32 32, 32
      %99 = vsyncadd [#allocation4], %s98
      %s101 = sshll.u32 [#allocation3], 4
      %s102 = int_to_ptr.vmem [resolvable:$true] %s101
      %104 = dma.vmem_to_hbm [thread:$0]  %s102, 32, %s4, [#allocation4]
    $region21: #{tpu_custom_call.1} parent=1 // pred_fallthru
      _
    // Predicated region
    $region22: #{tpu_custom_call.1} parent=1 // pred_check
      _
    $region23: #{tpu_custom_call.1} parent=1 // pred_check_branch
      %106 = sbr.rel (0) target = $region25
    $region24: #{tpu_custom_call.1} parent=1 // pred_region
      %107 = dma.done [#allocation4], 32
    $region25: #{tpu_custom_call.1} parent=1 // pred_fallthru
      _
    %108 = vsyncpa [#allocation4], 1

</llo_original>
